<compile_context>
chip_gen: v6e
topology: v6e:2x2x1
jax: 0.10.0
libtpu: 0.0.40
codegen_flags: <defaults>
</compile_context>

<pallas_src>
import functools

import jax
import jax.numpy as jnp
from jax.experimental import pallas as pl
from jax.experimental.pallas import tpu as pltpu


def _round_up(x, m):
    return (x + m - 1) // m * m


# Tap decomposition of the 4x4 / stride-2 / pad-1 conv after an even/odd parity split
# of the input:  input row = 2*ho + kh - 1 = 2*(ho + dh) + parity  ->  kh -> (parity, dh)
_DOWN_TAP = {0: (1, -1), 1: (0, 0), 2: (1, 0), 3: (0, 1)}


# ----------------------------- Pallas kernels -------------------------------

def _fused_conv_kernel(x_ref, wd_ref, wu_ref, hmask_ref, omask_ref, y_ref, *,
                       down_taps, up_offsets, l_h, tm_out, alpha):
    # x_ref:  (4, 1, Cin_p, L_x) bf16 -- 4 zero-framed parity planes of one image,
    #         flattened (Hp*Wp) grid with a (Wp+1)-lane lead-in + slack.
    # wd_ref: (Cmid_p, 16*Cin_p) bf16   down-conv weight, columns ordered (kh, kw, cin).
    # wu_ref: (4*Cout, 16*Cmid_p) bf16  block-diagonal up-conv weight (one 2x2 sub-kernel
    #         per output parity on the diagonal).
    # hmask_ref: (1, L_h) f32 0/1 -- valid (non-halo) lanes of the h grid.
    # omask_ref: (1, TM_out) f32 0/1 -- valid lanes of the up-conv output grid.
    # y_ref:  (1, 4*Cout, TM_out) bf16 -- 4 output-parity planes, invalid lanes zeroed.

    # LeakyReLU(0.2) in f32 (v5e-safe); leaky(0)=0 keeps the zero frame intact.
    planes = []
    for p in range(4):
        v = x_ref[p, 0].astype(jnp.float32)
        planes.append(jnp.where(v >= 0, v, alpha * v))

    # ---- down conv: 16 aligned (Cin_p, L_h) tap slices -> one (16*Cin_p, L_h) matmul ----
    a_dn = jnp.concatenate(
        [planes[p][:, t:t + l_h] for (p, t) in down_taps], axis=0
    ).astype(jnp.bfloat16)                                            # (16*Cin_p, L_h)
    hv = jnp.dot(wd_ref[...], a_dn, preferred_element_type=jnp.float32)  # (Cmid_p, L_h) f32

    # ReLU + zero the 1px halo / junk lanes of h in-kernel (multiplicative 0/1 mask).
    hv = jnp.maximum(hv, 0.0) * hmask_ref[...]

    # ---- up conv: 4 parities x 4 taps -> one block-diagonal K=16*Cmid_p matmul ----
    a_up = jnp.concatenate(
        [hv[:, t:t + tm_out] for t in up_offsets], axis=0
    ).astype(jnp.bfloat16)                                            # (16*Cmid_p, TM_out)
    y = jnp.dot(wu_ref[...], a_up, preferred_element_type=jnp.float32)   # (4*Cout, TM_out)

    # Zero invalid output lanes so the batch-stats reduction over the raw buffer is exact.
    y_ref[0] = (y * omask_ref[...]).astype(jnp.bfloat16)


def _bn_apply_concat_kernel(x_ref, y_ref, ss_ref, o_ref, *, c1):
    # training-mode BatchNorm apply (scale/shift precomputed from batch stats) + concat.
    # x_ref: (1, Cin, HW) f32   y_ref: (1, Cout, HW) bf16   ss_ref: (Cout, 2) f32
    o_ref[0, :c1, :] = x_ref[0]
    scale = ss_ref[:, 0:1]
    shift = ss_ref[:, 1:2]
    o_ref[0, c1:, :] = y_ref[0].astype(jnp.float32) * scale + shift


# --------------------------- parameter preprocessing -------------------------

def prepare_params(params):
    """One-time repack of PyTorch-layout weights into MXU-ready bf16 matrices."""
    w_down = params["w_down"].astype(jnp.float32)   # (Cmid, Cin, 4, 4)   Conv2d
    w_up = params["w_up"].astype(jnp.float32)       # (Cmid, Cout, 4, 4)  ConvTranspose2d
    cmid, cin = w_down.shape[:2]
    cout = w_up.shape[1]
    cin_p = _round_up(cin, 8)
    cmid_p = _round_up(cmid, 8)

    # down conv: (Cmid_p, 16*Cin_p), column order (kh, kw, cin); padded cin/cmid rows = 0.
    wd = jnp.pad(w_down, ((0, cmid_p - cmid), (0, cin_p - cin), (0, 0), (0, 0)))
    wd_mat = jnp.transpose(wd, (0, 2, 3, 1)).reshape(cmid_p, 16 * cin_p)

    # transposed conv: one (Cout, 4*Cmid_p) sub-kernel per output parity (py, px),
    # tap order [(0,0), (0,dj1), (di1,0), (di1,dj1)], packed block-diagonally.
    wu = jnp.pad(w_up, ((0, cmid_p - cmid), (0, 0), (0, 0), (0, 0)))

    def kidx(p, d):   # kernel index kh = py + 1 - 2*di  (and same for columns)
        return p + 1 if d == 0 else (3 if p == 0 else 0)

    parity_blocks = []
    for py in range(2):
        di1 = 2 * py - 1
        for px in range(2):
            dj1 = 2 * px - 1
            blocks = []
            for di in (0, di1):
                for dj in (0, dj1):
                    kh = kidx(py, di)
                    kw = kidx(px, dj)
                    blocks.append(jnp.transpose(wu[:, :, kh, kw]))      # (Cout, Cmid_p)
            parity_blocks.append(jnp.concatenate(blocks, axis=1))       # (Cout, 4*Cmid_p)
    zero = jnp.zeros((cout, 4 * cmid_p), jnp.float32)
    wu_bd = jnp.concatenate(
        [jnp.concatenate([parity_blocks[p] if q == p else zero for q in range(4)], axis=1)
         for p in range(4)], axis=0)                                    # (4*Cout, 16*Cmid_p)

    return {
        "wd_mat": wd_mat.astype(jnp.bfloat16),
        "wu_bd": wu_bd.astype(jnp.bfloat16),
        "gamma": params["gamma"].reshape(-1).astype(jnp.float32),
        "beta": params["beta"].reshape(-1).astype(jnp.float32),
    }


# ------------------------------- forward pass --------------------------------

def unet_innermost_forward(x_nchw, prepped):
    wd_mat = prepped["wd_mat"]          # (Cmid_p, 16*Cin_p) bf16
    wu_bd = prepped["wu_bd"]            # (4*Cout, 16*Cmid_p) bf16
    gamma, beta = prepped["gamma"], prepped["beta"]
    cin_p = wd_mat.shape[1] // 16
    cmid_p = wu_bd.shape[1] // 16
    cout = wu_bd.shape[0] // 4

    x = x_nchw.astype(jnp.float32)
    n, cin, hh, ww = x.shape
    ho, wo = hh // 2, ww // 2
    hp, wp = ho + 2, wo + 2
    lp = hp * wp                               # flattened padded per-image grid
    tm_out = _round_up(lp, 128)                # lane-dense y-parity output tile
    l_h = _round_up(tm_out + 2 * wp + 2, 128)  # h lanes incl. slack for up-conv taps
    l_x = _round_up(l_h + 2 * wp + 2, 128)     # x-plane lanes incl. slack for down taps

    # ---- parity split of x (+2px zero frame -> each parity plane carries its 1px halo),
    #      flattened with a (Wp+1)-lane lead-in so every down-conv tap offset is >= 0 ----
    xpad = jnp.pad(x, ((0, 0), (0, cin_p - cin), (2, 2), (2, 2)))
    planes = jnp.stack([xpad[:, :, pr::2, pc::2]
                        for pr in range(2) for pc in range(2)], axis=0)  # (4,N,Cin_p,Hp,Wp)
    xflat = jnp.pad(planes.reshape(4, n, cin_p, lp),
                    ((0, 0), (0, 0), (0, 0), (wp + 1, l_x - lp - (wp + 1))))
    xflat = xflat.astype(jnp.bfloat16)

    # static tap offsets (match the column order of wd_mat / wu_bd)
    down_taps = []
    for kh in range(4):
        pr, dh = _DOWN_TAP[kh]
        for kw in range(4):
            pc, dw = _DOWN_TAP[kw]
            down_taps.append((pr * 2 + pc, (dh + 1) * wp + (dw + 1)))
    down_taps = tuple(down_taps)

    up_offsets = []
    for py in range(2):
        di1 = 2 * py - 1
        for px in range(2):
            dj1 = 2 * px - 1
            for di in (0, di1):
                for dj in (0, dj1):
                    up_offsets.append((di + 1) * wp + (dj + 1))
    up_offsets = tuple(up_offsets)

    # 0/1 lane masks over the flattened (Hp, Wp) grids (constant-folded by XLA)
    qh = jnp.arange(l_h)
    hmask = ((qh // wp >= 1) & (qh // wp <= ho) &
             (qh % wp >= 1) & (qh % wp <= wo)).astype(jnp.float32).reshape(1, l_h)
    qo = jnp.arange(tm_out)
    omask = ((qo // wp < ho) & (qo % wp < wo)).astype(jnp.float32).reshape(1, tm_out)

    # ---- fused LeakyReLU -> down-conv -> ReLU -> up-conv (one pallas_call) ----
    y_par = pl.pallas_call(
        functools.partial(_fused_conv_kernel, down_taps=down_taps,
                          up_offsets=up_offsets, l_h=l_h, tm_out=tm_out, alpha=0.2),
        out_shape=jax.ShapeDtypeStruct((n, 4 * cout, tm_out), jnp.bfloat16),
        grid=(n,),
        in_specs=[pl.BlockSpec((4, 1, cin_p, l_x), lambda i: (0, i, 0, 0)),
                  pl.BlockSpec((cmid_p, 16 * cin_p), lambda i: (0, 0)),
                  pl.BlockSpec((4 * cout, 16 * cmid_p), lambda i: (0, 0)),
                  pl.BlockSpec((1, l_h), lambda i: (0, 0)),
                  pl.BlockSpec((1, tm_out), lambda i: (0, 0))],
        out_specs=pl.BlockSpec((1, 4 * cout, tm_out), lambda i: (i, 0, 0)),
        compiler_params=pltpu.CompilerParams(dimension_semantics=("parallel",)),
    )(xflat, wd_mat, wu_bd, hmask, omask)

    # ---- BatchNorm batch stats: an 8-number reduction in plain jnp (invalid lanes are
    #      already zeroed in-kernel, so the sums over the raw buffer are exact) ----
    count = float(n * hh * ww)
    ys = y_par.astype(jnp.float32)
    s1 = jnp.sum(ys, axis=(0, 2)).reshape(4, cout).sum(0)
    s2 = jnp.sum(ys * ys, axis=(0, 2)).reshape(4, cout).sum(0)
    mean = s1 / count
    var = s2 / count - mean * mean
    scale = gamma * jax.lax.rsqrt(var + 1e-5)
    shift = beta - mean * scale
    ss = jnp.stack([scale, shift], axis=1)                          # (Cout, 2) f32

    # ---- interleave the 4 output parities into y (tiny bf16 array) ----
    yg = y_par[:, :, :lp].reshape(n, 2, 2, cout, hp, wp)[:, :, :, :, :ho, :wo]
    y_hw = jnp.transpose(yg, (0, 3, 4, 1, 5, 2)).reshape(n, cout, hh * ww)

    # ---- BN apply + channel concat (lane dim = H*W) ----
    x_hw = x.reshape(n, cin, hh * ww)
    out_hw = pl.pallas_call(
        functools.partial(_bn_apply_concat_kernel, c1=cin),
        out_shape=jax.ShapeDtypeStruct((n, cin + cout, hh * ww), jnp.float32),
        grid=(n,),
        in_specs=[pl.BlockSpec((1, cin, hh * ww), lambda i: (i, 0, 0)),
                  pl.BlockSpec((1, cout, hh * ww), lambda i: (i, 0, 0)),
                  pl.BlockSpec((cout, 2), lambda i: (0, 0))],
        out_specs=pl.BlockSpec((1, cin + cout, hh * ww), lambda i: (i, 0, 0)),
        compiler_params=pltpu.CompilerParams(dimension_semantics=("parallel",)),
    )(x_hw, y_hw, ss)

    return out_hw.reshape(n, cin + cout, hh, ww)


# Pure-JAX reference (matches PyTorch semantics) used to validate the kernels.
def reference_forward(x_nchw, params):
    x = jnp.transpose(x_nchw, (0, 2, 3, 1)).astype(jnp.float32)
    w_down, w_up = params["w_down"], params["w_up"]
    h = jax.lax.conv_general_dilated(
        jnp.where(x >= 0, x, 0.2 * x), w_down, (2, 2), [(1, 1), (1, 1)],
        dimension_numbers=("NHWC", "OIHW", "NHWC"))
    w_up_eq = jnp.flip(w_up, axis=(2, 3)).transpose(1, 0, 2, 3)  # (outer_nc, inner_nc, 4, 4)
    y = jax.lax.conv_general_dilated(
        jnp.maximum(h, 0.0), w_up_eq, (1, 1), [(2, 2), (2, 2)],
        lhs_dilation=(2, 2), dimension_numbers=("NHWC", "OIHW", "NHWC"))
    mean = jnp.mean(y, axis=(0, 1, 2), keepdims=True)
    var = jnp.mean((y - mean) ** 2, axis=(0, 1, 2), keepdims=True)
    y = (y - mean) * params["gamma"] / jnp.sqrt(var + 1e-5) + params["beta"]
    out = jnp.concatenate([x, y], axis=-1)
    return jnp.transpose(out, (0, 3, 1, 2))


if __name__ == "__main__":
    # Innermost block: outer_nc=4, inner_nc=8, input_nc defaults to outer_nc.
    N, outer_nc, inner_nc, H, W = 2, 4, 8, 16, 16

    key = jax.random.PRNGKey(0)
    kx, kd, ku, kg, kb = jax.random.split(key, 5)

    x = jax.random.normal(kx, (N, outer_nc, H, W), dtype=jnp.float32)
    params = {
        # nn.Conv2d(input_nc, inner_nc, 4, 2, 1, bias=False)
        "w_down": 0.1 * jax.random.normal(kd, (inner_nc, outer_nc, 4, 4), dtype=jnp.float32),
        # nn.ConvTranspose2d(inner_nc, outer_nc, 4, 2, 1, bias=False)
        "w_up": 0.1 * jax.random.normal(ku, (inner_nc, outer_nc, 4, 4), dtype=jnp.float32),
        # nn.BatchNorm2d(outer_nc) affine params
        "gamma": 1.0 + 0.1 * jax.random.normal(kg, (outer_nc,), dtype=jnp.float32),
        "beta": 0.1 * jax.random.normal(kb, (outer_nc,), dtype=jnp.float32),
    }

    prepped = prepare_params(params)            # one-time weight repack (hoisted)
    fwd = jax.jit(unet_innermost_forward)
    out = fwd(x, prepped)
    jax.block_until_ready(out)

    ref = reference_forward(x, params)
    assert out.shape == (N, 2 * outer_nc, H, W), out.shape
    err = float(jnp.max(jnp.abs(out - ref)))
    # bf16 MXU operands / bf16 intermediate storage with f32 accumulation
    assert jnp.allclose(out, ref, atol=5e-2, rtol=5e-2), err

    print("KERNEL_OK")
</pallas_src>

<mosaic_0001>
module attributes {stable_mosaic.version = 11 : i64} {
  func.func @_fused_conv_kernel(%arg0: i32, %arg1: memref<4x1x8x384xbf16, #tpu.memory_space<vmem>>, %arg2: memref<8x128xbf16, #tpu.memory_space<vmem>>, %arg3: memref<16x128xbf16, #tpu.memory_space<vmem>>, %arg4: memref<1x256xf32, #tpu.memory_space<vmem>>, %arg5: memref<1x128xf32, #tpu.memory_space<vmem>>, %arg6: memref<1x16x128xbf16, #tpu.memory_space<vmem>>) attributes {dimension_semantics = [#tpu.dimension_semantics<parallel>], iteration_bounds = array<i64: 2>, scalar_prefetch = 0 : i64, scratch_operands = 0 : i64, tpu.core_type = #tpu.core_type<tc>, window_params = [{transform_indices = @transform_0, window_bounds = array<i64: 4, 1, 8, 384>}, {pipeline_mode = #tpu.pipeline_mode<synchronous>, transform_indices = @transform_1, window_bounds = array<i64: 8, 128>}, {pipeline_mode = #tpu.pipeline_mode<synchronous>, transform_indices = @transform_2, window_bounds = array<i64: 16, 128>}, {pipeline_mode = #tpu.pipeline_mode<synchronous>, transform_indices = @transform_3, window_bounds = array<i64: 1, 256>}, {pipeline_mode = #tpu.pipeline_mode<synchronous>, transform_indices = @transform_4, window_bounds = array<i64: 1, 128>}, {transform_indices = @transform_5, window_bounds = array<i64: 1, 16, 128>}]} {
    %c0 = arith.constant 0 : index
    %c0_0 = arith.constant 0 : index
    %c0_1 = arith.constant 0 : index
    %c0_2 = arith.constant 0 : index
    %0 = vector.load %arg1[%c0, %c0_0, %c0_1, %c0_2] : memref<4x1x8x384xbf16, #tpu.memory_space<vmem>>, vector<1x1x8x384xbf16>
    %1 = vector.shape_cast %0 : vector<1x1x8x384xbf16> to vector<8x384xbf16>
    %2 = arith.extf %1 : vector<8x384xbf16> to vector<8x384xf32>
    %cst = arith.constant 0.000000e+00 : f32
    %3 = vector.broadcast %cst : f32 to vector<8x384xf32>
    %4 = arith.cmpf oge, %2, %3 : vector<8x384xf32>
    %cst_3 = arith.constant 2.000000e-01 : f32
    %5 = vector.broadcast %cst_3 : f32 to vector<8x384xf32>
    %6 = arith.mulf %5, %2 : vector<8x384xf32>
    %7 = arith.select %4, %2, %6 : vector<8x384xi1>, vector<8x384xf32>
    %c1 = arith.constant 1 : index
    %c0_4 = arith.constant 0 : index
    %c0_5 = arith.constant 0 : index
    %c0_6 = arith.constant 0 : index
    %8 = vector.load %arg1[%c1, %c0_4, %c0_5, %c0_6] : memref<4x1x8x384xbf16, #tpu.memory_space<vmem>>, vector<1x1x8x384xbf16>
    %9 = vector.shape_cast %8 : vector<1x1x8x384xbf16> to vector<8x384xbf16>
    %10 = arith.extf %9 : vector<8x384xbf16> to vector<8x384xf32>
    %cst_7 = arith.constant 0.000000e+00 : f32
    %11 = vector.broadcast %cst_7 : f32 to vector<8x384xf32>
    %12 = arith.cmpf oge, %10, %11 : vector<8x384xf32>
    %cst_8 = arith.constant 2.000000e-01 : f32
    %13 = vector.broadcast %cst_8 : f32 to vector<8x384xf32>
    %14 = arith.mulf %13, %10 : vector<8x384xf32>
    %15 = arith.select %12, %10, %14 : vector<8x384xi1>, vector<8x384xf32>
    %c2 = arith.constant 2 : index
    %c0_9 = arith.constant 0 : index
    %c0_10 = arith.constant 0 : index
    %c0_11 = arith.constant 0 : index
    %16 = vector.load %arg1[%c2, %c0_9, %c0_10, %c0_11] : memref<4x1x8x384xbf16, #tpu.memory_space<vmem>>, vector<1x1x8x384xbf16>
    %17 = vector.shape_cast %16 : vector<1x1x8x384xbf16> to vector<8x384xbf16>
    %18 = arith.extf %17 : vector<8x384xbf16> to vector<8x384xf32>
    %cst_12 = arith.constant 0.000000e+00 : f32
    %19 = vector.broadcast %cst_12 : f32 to vector<8x384xf32>
    %20 = arith.cmpf oge, %18, %19 : vector<8x384xf32>
    %cst_13 = arith.constant 2.000000e-01 : f32
    %21 = vector.broadcast %cst_13 : f32 to vector<8x384xf32>
    %22 = arith.mulf %21, %18 : vector<8x384xf32>
    %23 = arith.select %20, %18, %22 : vector<8x384xi1>, vector<8x384xf32>
    %c3 = arith.constant 3 : index
    %c0_14 = arith.constant 0 : index
    %c0_15 = arith.constant 0 : index
    %c0_16 = arith.constant 0 : index
    %24 = vector.load %arg1[%c3, %c0_14, %c0_15, %c0_16] : memref<4x1x8x384xbf16, #tpu.memory_space<vmem>>, vector<1x1x8x384xbf16>
    %25 = vector.shape_cast %24 : vector<1x1x8x384xbf16> to vector<8x384xbf16>
    %26 = arith.extf %25 : vector<8x384xbf16> to vector<8x384xf32>
    %cst_17 = arith.constant 0.000000e+00 : f32
    %27 = vector.broadcast %cst_17 : f32 to vector<8x384xf32>
    %28 = arith.cmpf oge, %26, %27 : vector<8x384xf32>
    %cst_18 = arith.constant 2.000000e-01 : f32
    %29 = vector.broadcast %cst_18 : f32 to vector<8x384xf32>
    %30 = arith.mulf %29, %26 : vector<8x384xf32>
    %31 = arith.select %28, %26, %30 : vector<8x384xi1>, vector<8x384xf32>
    %32 = vector.extract_strided_slice %31 {offsets = [0, 0], sizes = [8, 256], strides = [1, 1]} : vector<8x384xf32> to vector<8x256xf32>
    %33 = vector.extract_strided_slice %23 {offsets = [0, 1], sizes = [8, 256], strides = [1, 1]} : vector<8x384xf32> to vector<8x256xf32>
    %34 = vector.extract_strided_slice %31 {offsets = [0, 1], sizes = [8, 256], strides = [1, 1]} : vector<8x384xf32> to vector<8x256xf32>
    %35 = vector.extract_strided_slice %23 {offsets = [0, 2], sizes = [8, 256], strides = [1, 1]} : vector<8x384xf32> to vector<8x256xf32>
    %36 = vector.extract_strided_slice %15 {offsets = [0, 10], sizes = [8, 256], strides = [1, 1]} : vector<8x384xf32> to vector<8x256xf32>
    %37 = vector.extract_strided_slice %7 {offsets = [0, 11], sizes = [8, 256], strides = [1, 1]} : vector<8x384xf32> to vector<8x256xf32>
    %38 = vector.extract_strided_slice %15 {offsets = [0, 11], sizes = [8, 256], strides = [1, 1]} : vector<8x384xf32> to vector<8x256xf32>
    %39 = vector.extract_strided_slice %7 {offsets = [0, 12], sizes = [8, 256], strides = [1, 1]} : vector<8x384xf32> to vector<8x256xf32>
    %40 = vector.extract_strided_slice %31 {offsets = [0, 10], sizes = [8, 256], strides = [1, 1]} : vector<8x384xf32> to vector<8x256xf32>
    %41 = vector.extract_strided_slice %23 {offsets = [0, 11], sizes = [8, 256], strides = [1, 1]} : vector<8x384xf32> to vector<8x256xf32>
    %42 = vector.extract_strided_slice %31 {offsets = [0, 11], sizes = [8, 256], strides = [1, 1]} : vector<8x384xf32> to vector<8x256xf32>
    %43 = vector.extract_strided_slice %23 {offsets = [0, 12], sizes = [8, 256], strides = [1, 1]} : vector<8x384xf32> to vector<8x256xf32>
    %44 = vector.extract_strided_slice %15 {offsets = [0, 20], sizes = [8, 256], strides = [1, 1]} : vector<8x384xf32> to vector<8x256xf32>
    %45 = vector.extract_strided_slice %7 {offsets = [0, 21], sizes = [8, 256], strides = [1, 1]} : vector<8x384xf32> to vector<8x256xf32>
    %46 = vector.extract_strided_slice %15 {offsets = [0, 21], sizes = [8, 256], strides = [1, 1]} : vector<8x384xf32> to vector<8x256xf32>
    %47 = vector.extract_strided_slice %7 {offsets = [0, 22], sizes = [8, 256], strides = [1, 1]} : vector<8x384xf32> to vector<8x256xf32>
    %48 = tpu.concatenate %32, %33, %34, %35, %36, %37, %38, %39, %40, %41, %42, %43, %44, %45, %46, %47 in 0 : vector<8x256xf32>, vector<8x256xf32>, vector<8x256xf32>, vector<8x256xf32>, vector<8x256xf32>, vector<8x256xf32>, vector<8x256xf32>, vector<8x256xf32>, vector<8x256xf32>, vector<8x256xf32>, vector<8x256xf32>, vector<8x256xf32>, vector<8x256xf32>, vector<8x256xf32>, vector<8x256xf32>, vector<8x256xf32> -> vector<128x256xf32>
    %49 = arith.truncf %48 : vector<128x256xf32> to vector<128x256xbf16>
    %c0_19 = arith.constant 0 : index
    %c0_20 = arith.constant 0 : index
    %50 = vector.load %arg2[%c0_19, %c0_20] : memref<8x128xbf16, #tpu.memory_space<vmem>>, vector<8x128xbf16>
    %cst_21 = arith.constant dense<0.000000e+00> : vector<8x256xf32>
    %51 = tpu.matmul %50, %49, %cst_21 {dimension_numbers = #tpu.dot_dimension_numbers<[1], [0], [0], [1], [0, 0, 1, 1], [], []>} : vector<8x128xbf16>, vector<128x256xbf16>, vector<8x256xf32> -> vector<8x256xf32>
    %cst_22 = arith.constant 0.000000e+00 : f32
    %52 = vector.broadcast %cst_22 : f32 to vector<8x256xf32>
    %53 = arith.maximumf %51, %52 : vector<8x256xf32>
    %c0_23 = arith.constant 0 : index
    %c0_24 = arith.constant 0 : index
    %54 = vector.load %arg4[%c0_23, %c0_24] : memref<1x256xf32, #tpu.memory_space<vmem>>, vector<1x256xf32>
    %55 = vector.broadcast %54 : vector<1x256xf32> to vector<8x256xf32>
    %56 = arith.mulf %53, %55 : vector<8x256xf32>
    %57 = vector.extract_strided_slice %56 {offsets = [0, 11], sizes = [8, 128], strides = [1, 1]} : vector<8x256xf32> to vector<8x128xf32>
    %58 = vector.extract_strided_slice %56 {offsets = [0, 10], sizes = [8, 128], strides = [1, 1]} : vector<8x256xf32> to vector<8x128xf32>
    %59 = vector.extract_strided_slice %56 {offsets = [0, 1], sizes = [8, 128], strides = [1, 1]} : vector<8x256xf32> to vector<8x128xf32>
    %60 = vector.extract_strided_slice %56 {offsets = [0, 0], sizes = [8, 128], strides = [1, 1]} : vector<8x256xf32> to vector<8x128xf32>
    %61 = vector.extract_strided_slice %56 {offsets = [0, 11], sizes = [8, 128], strides = [1, 1]} : vector<8x256xf32> to vector<8x128xf32>
    %62 = vector.extract_strided_slice %56 {offsets = [0, 12], sizes = [8, 128], strides = [1, 1]} : vector<8x256xf32> to vector<8x128xf32>
    %63 = vector.extract_strided_slice %56 {offsets = [0, 1], sizes = [8, 128], strides = [1, 1]} : vector<8x256xf32> to vector<8x128xf32>
    %64 = vector.extract_strided_slice %56 {offsets = [0, 2], sizes = [8, 128], strides = [1, 1]} : vector<8x256xf32> to vector<8x128xf32>
    %65 = vector.extract_strided_slice %56 {offsets = [0, 11], sizes = [8, 128], strides = [1, 1]} : vector<8x256xf32> to vector<8x128xf32>
    %66 = vector.extract_strided_slice %56 {offsets = [0, 10], sizes = [8, 128], strides = [1, 1]} : vector<8x256xf32> to vector<8x128xf32>
    %67 = vector.extract_strided_slice %56 {offsets = [0, 21], sizes = [8, 128], strides = [1, 1]} : vector<8x256xf32> to vector<8x128xf32>
    %68 = vector.extract_strided_slice %56 {offsets = [0, 20], sizes = [8, 128], strides = [1, 1]} : vector<8x256xf32> to vector<8x128xf32>
    %69 = vector.extract_strided_slice %56 {offsets = [0, 11], sizes = [8, 128], strides = [1, 1]} : vector<8x256xf32> to vector<8x128xf32>
    %70 = vector.extract_strided_slice %56 {offsets = [0, 12], sizes = [8, 128], strides = [1, 1]} : vector<8x256xf32> to vector<8x128xf32>
    %71 = vector.extract_strided_slice %56 {offsets = [0, 21], sizes = [8, 128], strides = [1, 1]} : vector<8x256xf32> to vector<8x128xf32>
    %72 = vector.extract_strided_slice %56 {offsets = [0, 22], sizes = [8, 128], strides = [1, 1]} : vector<8x256xf32> to vector<8x128xf32>
    %73 = tpu.concatenate %57, %58, %59, %60, %61, %62, %63, %64, %65, %66, %67, %68, %69, %70, %71, %72 in 0 : vector<8x128xf32>, vector<8x128xf32>, vector<8x128xf32>, vector<8x128xf32>, vector<8x128xf32>, vector<8x128xf32>, vector<8x128xf32>, vector<8x128xf32>, vector<8x128xf32>, vector<8x128xf32>, vector<8x128xf32>, vector<8x128xf32>, vector<8x128xf32>, vector<8x128xf32>, vector<8x128xf32>, vector<8x128xf32> -> vector<128x128xf32>
    %74 = arith.truncf %73 : vector<128x128xf32> to vector<128x128xbf16>
    %c0_25 = arith.constant 0 : index
    %c0_26 = arith.constant 0 : index
    %75 = vector.load %arg3[%c0_25, %c0_26] : memref<16x128xbf16, #tpu.memory_space<vmem>>, vector<16x128xbf16>
    %cst_27 = arith.constant dense<0.000000e+00> : vector<16x128xf32>
    %76 = tpu.matmul %75, %74, %cst_27 {dimension_numbers = #tpu.dot_dimension_numbers<[1], [0], [0], [1], [0, 0, 1, 1], [], []>} : vector<16x128xbf16>, vector<128x128xbf16>, vector<16x128xf32> -> vector<16x128xf32>
    %c0_28 = arith.constant 0 : index
    %c0_29 = arith.constant 0 : index
    %77 = vector.load %arg5[%c0_28, %c0_29] : memref<1x128xf32, #tpu.memory_space<vmem>>, vector<1x128xf32>
    %78 = vector.broadcast %77 : vector<1x128xf32> to vector<16x128xf32>
    %79 = arith.mulf %76, %78 : vector<16x128xf32>
    %80 = arith.truncf %79 : vector<16x128xf32> to vector<16x128xbf16>
    %c0_30 = arith.constant 0 : index
    %c0_31 = arith.constant 0 : index
    %c0_32 = arith.constant 0 : index
    %81 = vector.load %arg6[%c0_30, %c0_31, %c0_32] : memref<1x16x128xbf16, #tpu.memory_space<vmem>>, vector<1x16x128xbf16>
    %82 = vector.shape_cast %81 : vector<1x16x128xbf16> to vector<16x128xbf16>
    %83 = vector.shape_cast %80 : vector<16x128xbf16> to vector<1x16x128xbf16>
    tpu.vector_store %arg6[%c0_30, %c0_31, %c0_32], %83 {strides = array<i32>} : memref<1x16x128xbf16, #tpu.memory_space<vmem>>, vector<1x16x128xbf16>,
    return
  }
  func.func @transform_0(%arg0: i32) -> (i32, i32, i32, i32) {
    %c0_i32 = arith.constant 0 : i32
    %c0_i32_0 = arith.constant 0 : i32
    %c0_i32_1 = arith.constant 0 : i32
    %c0_i32_2 = arith.constant 0 : i32
    return %c0_i32, %arg0, %c0_i32_0, %c0_i32_1 : i32, i32, i32, i32
  }
  func.func @transform_1(%arg0: i32) -> (i32, i32) {
    %c0_i32 = arith.constant 0 : i32
    %c0_i32_0 = arith.constant 0 : i32
    %c0_i32_1 = arith.constant 0 : i32
    return %c0_i32, %c0_i32_0 : i32, i32
  }
  func.func @transform_2(%arg0: i32) -> (i32, i32) {
    %c0_i32 = arith.constant 0 : i32
    %c0_i32_0 = arith.constant 0 : i32
    %c0_i32_1 = arith.constant 0 : i32
    return %c0_i32, %c0_i32_0 : i32, i32
  }
  func.func @transform_3(%arg0: i32) -> (i32, i32) {
    %c0_i32 = arith.constant 0 : i32
    %c0_i32_0 = arith.constant 0 : i32
    %c0_i32_1 = arith.constant 0 : i32
    return %c0_i32, %c0_i32_0 : i32, i32
  }
  func.func @transform_4(%arg0: i32) -> (i32, i32) {
    %c0_i32 = arith.constant 0 : i32
    %c0_i32_0 = arith.constant 0 : i32
    %c0_i32_1 = arith.constant 0 : i32
    return %c0_i32, %c0_i32_0 : i32, i32
  }
  func.func @transform_5(%arg0: i32) -> (i32, i32, i32) {
    %c0_i32 = arith.constant 0 : i32
    %c0_i32_0 = arith.constant 0 : i32
    %c0_i32_1 = arith.constant 0 : i32
    return %arg0, %c0_i32, %c0_i32_0 : i32, i32, i32
  }
}

module attributes {stable_mosaic.version = 11 : i64} {
  func.func @_bn_apply_concat_kernel(%arg0: i32, %arg1: memref<1x4x256xf32, #tpu.memory_space<vmem>>, %arg2: memref<1x4x256xbf16, #tpu.memory_space<vmem>>, %arg3: memref<4x2xf32, #tpu.memory_space<vmem>>, %arg4: memref<1x8x256xf32, #tpu.memory_space<vmem>>) attributes {dimension_semantics = [#tpu.dimension_semantics<parallel>], iteration_bounds = array<i64: 2>, scalar_prefetch = 0 : i64, scratch_operands = 0 : i64, tpu.core_type = #tpu.core_type<tc>, window_params = [{transform_indices = @transform_0, window_bounds = array<i64: 1, 4, 256>}, {transform_indices = @transform_1, window_bounds = array<i64: 1, 4, 256>}, {pipeline_mode = #tpu.pipeline_mode<synchronous>, transform_indices = @transform_2, window_bounds = array<i64: 4, 2>}, {transform_indices = @transform_3, window_bounds = array<i64: 1, 8, 256>}]} {
    %c0 = arith.constant 0 : index
    %c0_0 = arith.constant 0 : index
    %c0_1 = arith.constant 0 : index
    %0 = vector.load %arg1[%c0, %c0_0, %c0_1] : memref<1x4x256xf32, #tpu.memory_space<vmem>>, vector<1x4x256xf32>
    %1 = vector.shape_cast %0 : vector<1x4x256xf32> to vector<4x256xf32>
    %c0_2 = arith.constant 0 : index
    %c0_3 = arith.constant 0 : index
    %c0_4 = arith.constant 0 : index
    %2 = vector.load %arg4[%c0_2, %c0_3, %c0_4] : memref<1x8x256xf32, #tpu.memory_space<vmem>>, vector<1x4x256xf32>
    %3 = vector.shape_cast %2 : vector<1x4x256xf32> to vector<4x256xf32>
    %4 = vector.shape_cast %1 : vector<4x256xf32> to vector<1x4x256xf32>
    tpu.vector_store %arg4[%c0_2, %c0_3, %c0_4], %4 {strides = array<i32>} : memref<1x8x256xf32, #tpu.memory_space<vmem>>, vector<1x4x256xf32>,
    %c0_5 = arith.constant 0 : index
    %c0_6 = arith.constant 0 : index
    %5 = vector.load %arg3[%c0_5, %c0_6] : memref<4x2xf32, #tpu.memory_space<vmem>>, vector<4x1xf32>
    %c0_7 = arith.constant 0 : index
    %c1 = arith.constant 1 : index
    %6 = vector.load %arg3[%c0_7, %c1] : memref<4x2xf32, #tpu.memory_space<vmem>>, vector<4x1xf32>
    %c0_8 = arith.constant 0 : index
    %c0_9 = arith.constant 0 : index
    %c0_10 = arith.constant 0 : index
    %7 = vector.load %arg2[%c0_8, %c0_9, %c0_10] : memref<1x4x256xbf16, #tpu.memory_space<vmem>>, vector<1x4x256xbf16>
    %8 = vector.shape_cast %7 : vector<1x4x256xbf16> to vector<4x256xbf16>
    %9 = arith.extf %8 : vector<4x256xbf16> to vector<4x256xf32>
    %10 = vector.broadcast %5 : vector<4x1xf32> to vector<4x256xf32>
    %11 = arith.mulf %9, %10 : vector<4x256xf32>
    %12 = vector.broadcast %6 : vector<4x1xf32> to vector<4x256xf32>
    %13 = arith.addf %11, %12 : vector<4x256xf32>
    %c0_11 = arith.constant 0 : index
    %c4 = arith.constant 4 : index
    %c0_12 = arith.constant 0 : index
    %14 = vector.load %arg4[%c0_11, %c4, %c0_12] : memref<1x8x256xf32, #tpu.memory_space<vmem>>, vector<1x4x256xf32>
    %15 = vector.shape_cast %14 : vector<1x4x256xf32> to vector<4x256xf32>
    %16 = vector.shape_cast %13 : vector<4x256xf32> to vector<1x4x256xf32>
    tpu.vector_store %arg4[%c0_11, %c4, %c0_12], %16 {strides = array<i32>} : memref<1x8x256xf32, #tpu.memory_space<vmem>>, vector<1x4x256xf32>,
    return
  }
  func.func @transform_0(%arg0: i32) -> (i32, i32, i32) {
    %c0_i32 = arith.constant 0 : i32
    %c0_i32_0 = arith.constant 0 : i32
    %c0_i32_1 = arith.constant 0 : i32
    return %arg0, %c0_i32, %c0_i32_0 : i32, i32, i32
  }
  func.func @transform_1(%arg0: i32) -> (i32, i32, i32) {
    %c0_i32 = arith.constant 0 : i32
    %c0_i32_0 = arith.constant 0 : i32
    %c0_i32_1 = arith.constant 0 : i32
    return %arg0, %c0_i32, %c0_i32_0 : i32, i32, i32
  }
  func.func @transform_2(%arg0: i32) -> (i32, i32) {
    %c0_i32 = arith.constant 0 : i32
    %c0_i32_0 = arith.constant 0 : i32
    %c0_i32_1 = arith.constant 0 : i32
    return %c0_i32, %c0_i32_0 : i32, i32
  }
  func.func @transform_3(%arg0: i32) -> (i32, i32, i32) {
    %c0_i32 = arith.constant 0 : i32
    %c0_i32_0 = arith.constant 0 : i32
    %c0_i32_1 = arith.constant 0 : i32
    return %arg0, %c0_i32, %c0_i32_0 : i32, i32, i32
  }
}

</mosaic_0001>

<llo_original>
// kernel: unet_innermost_forward.2
$region0: #{unet_innermost_forward.2}
  #allocation0 [shape = 'u32[]', space=smem, size = 0x4, offset = 0x4, fixed_abs, tag = 'smem constant byte address 0x4 - core index']
  #allocation1 [shape = 'u32[144,128]{1,0:T(1,128)}', space=vmem, size = 0x12000, scoped, tag = 'internal scratch']
  %s0 = inlined_call_operand.vmem [shape: bf16[4,2,8,384], index: 0, kind: input, shape index: {}]
  %s1 = inlined_call_operand.vmem [shape: bf16[8,128], index: 1, kind: input, shape index: {}]
  %s2 = inlined_call_operand.vmem [shape: bf16[16,128], index: 2, kind: input, shape index: {}]
  %s3 = inlined_call_operand.vmem [shape: f32[1,256], index: 3, kind: input, shape index: {}]
  %s4 = inlined_call_operand.vmem [shape: f32[1,128], index: 4, kind: input, shape index: {}]
  %s5 = inlined_call_operand.vmem [shape: bf16[2,16,128], index: 5, kind: output, shape index: {}]
  %s6 = sld [smem:[#allocation0]]
  $region79: #{unet_innermost_forward.2} parent=0
    _
  %s8 = ssub.s32 1, %s6
  %s9 = scalar_select 0, %s8, %s6
  $region1: #{unet_innermost_forward.2} parent=0
    #allocation2 [shape = 'u8[49152]{0}', space=vmem, size = 0xc000, scoped, tag = 'input window, operand 0']
    loop: start=0, step=1, limit=4
    $region2: #{unet_innermost_forward.2} parent=1 // loop_pre_header
      _
    $region3: #{unet_innermost_forward.2} parent=1 // loop_header
      %s11 = sphi 0, %s15
      %p12 = scmp.ge.s32.totalorder %s11, 4
      %s21 = sphi 0, %s23
      %s24 = sphi 0, %s21
      %s25 = sphi 0, %s24
      %s41 = sphi 0, %s25
      %s45 = sphi 0, %s45
      %s47 = sphi 0, %s45
      %s48 = sphi 0, %s47
      %s62 = sphi 0, %s48
      %s66 = sphi 0, %s66
      %s68 = sphi 0, %s66
      %s69 = sphi 0, %s68
      %s83 = sphi 0, %s69
      %s87 = sphi 0, %s87
      %s89 = sphi 0, %s87
      %s90 = sphi 0, %s89
      %s104 = sphi 0, %s90
      %s108 = sphi 0, %s108
      %s110 = sphi 0, %s108
      %s111 = sphi 0, %s110
      %s125 = sphi 0, %s111
      %s131 = sphi 0, %s133
      %s134 = sphi 0, %s131
      %s135 = sphi 0, %s134
      %s151 = sphi 0, %s135
    $region4: #{unet_innermost_forward.2} parent=1 // loop_header_branch
      %14 = sbr.rel (%p12) target = $region8
    $region5: #{unet_innermost_forward.2} parent=1 // loop_body
      %s16 = ssub.s32 %s11, 1
      %s17 = ssub.s32 %s11, 2
      %s18 = sadd.s32 %s11, 1
      %s19 = ssub.s32 %s11, %s18
      %p20 = scmp.eq.s32.totalorder %s19, 0
      %s22 = sadd.s32 %s21, 1
      %s23 = scalar_select %p20, %s21, %s22
      %p26 = pneg %p20
      %p27 = scmp.eq.s32.totalorder %s11, 1
      %p28 = por %p26, %p27
      %p29 = scmp.ne.s32.totalorder %s21, %s24
      %p30 = scmp.eq.s32.totalorder %s11, 0
      %p31 = por %p29, %p30
      %p32 = scmp.ne.s32.totalorder %s21, %s24
      %p33 = scmp.eq.s32.totalorder %s16, 1
      %p34 = por %p32, %p33
      %p35 = scmp.ne.s32.totalorder %s24, %s25
      %p36 = scmp.eq.s32.totalorder %s16, 0
      %p37 = por %p35, %p36
      %p38 = scmp.ne.s32.totalorder %s24, %s25
      %p39 = scmp.eq.s32.totalorder %s17, 1
      %p40 = por %p38, %p39
      %p42 = scmp.ne.s32.totalorder %s25, %s41
      %p43 = scmp.eq.s32.totalorder %s17, 0
      %p44 = por %p42, %p43
      %s46 = sadd.s32 %s45, 1
      %p49 = scmp.eq.s32.totalorder %s11, 1
      %p50 = scmp.ne.s32.totalorder %s45, %s47
      %p51 = scmp.eq.s32.totalorder %s11, 0
      %p52 = por %p50, %p51
      %p53 = scmp.ne.s32.totalorder %s45, %s47
      %p54 = scmp.eq.s32.totalorder %s16, 1
      %p55 = por %p53, %p54
      %p56 = scmp.ne.s32.totalorder %s47, %s48
      %p57 = scmp.eq.s32.totalorder %s16, 0
      %p58 = por %p56, %p57
      %p59 = scmp.ne.s32.totalorder %s47, %s48
      %p60 = scmp.eq.s32.totalorder %s17, 1
      %p61 = por %p59, %p60
      %p63 = scmp.ne.s32.totalorder %s48, %s62
      %p64 = scmp.eq.s32.totalorder %s17, 0
      %p65 = por %p63, %p64
      %s67 = sadd.s32 %s66, 1
      %p70 = scmp.eq.s32.totalorder %s11, 1
      %p71 = scmp.ne.s32.totalorder %s66, %s68
      %p72 = scmp.eq.s32.totalorder %s11, 0
      %p73 = por %p71, %p72
      %p74 = scmp.ne.s32.totalorder %s66, %s68
      %p75 = scmp.eq.s32.totalorder %s16, 1
      %p76 = por %p74, %p75
      %p77 = scmp.ne.s32.totalorder %s68, %s69
      %p78 = scmp.eq.s32.totalorder %s16, 0
      %p79 = por %p77, %p78
      %p80 = scmp.ne.s32.totalorder %s68, %s69
      %p81 = scmp.eq.s32.totalorder %s17, 1
      %p82 = por %p80, %p81
      %p84 = scmp.ne.s32.totalorder %s69, %s83
      %p85 = scmp.eq.s32.totalorder %s17, 0
      %p86 = por %p84, %p85
      %s88 = sadd.s32 %s87, 1
      %p91 = scmp.eq.s32.totalorder %s11, 1
      %p92 = scmp.ne.s32.totalorder %s87, %s89
      %p93 = scmp.eq.s32.totalorder %s11, 0
      %p94 = por %p92, %p93
      %p95 = scmp.ne.s32.totalorder %s87, %s89
      %p96 = scmp.eq.s32.totalorder %s16, 1
      %p97 = por %p95, %p96
      %p98 = scmp.ne.s32.totalorder %s89, %s90
      %p99 = scmp.eq.s32.totalorder %s16, 0
      %p100 = por %p98, %p99
      %p101 = scmp.ne.s32.totalorder %s89, %s90
      %p102 = scmp.eq.s32.totalorder %s17, 1
      %p103 = por %p101, %p102
      %p105 = scmp.ne.s32.totalorder %s90, %s104
      %p106 = scmp.eq.s32.totalorder %s17, 0
      %p107 = por %p105, %p106
      %s109 = sadd.s32 %s108, 1
      %p112 = scmp.eq.s32.totalorder %s11, 1
      %p113 = scmp.ne.s32.totalorder %s108, %s110
      %p114 = scmp.eq.s32.totalorder %s11, 0
      %p115 = por %p113, %p114
      %p116 = scmp.ne.s32.totalorder %s108, %s110
      %p117 = scmp.eq.s32.totalorder %s16, 1
      %p118 = por %p116, %p117
      %p119 = scmp.ne.s32.totalorder %s110, %s111
      %p120 = scmp.eq.s32.totalorder %s16, 0
      %p121 = por %p119, %p120
      %p122 = scmp.ne.s32.totalorder %s110, %s111
      %p123 = scmp.eq.s32.totalorder %s17, 1
      %p124 = por %p122, %p123
      %p126 = scmp.ne.s32.totalorder %s111, %s125
      %p127 = scmp.eq.s32.totalorder %s17, 0
      %p128 = por %p126, %p127
      %s129 = ssub.s32 %s11, %s18
      %p130 = scmp.eq.s32.totalorder %s129, 0
      %s132 = sadd.s32 %s131, 1
      %s133 = scalar_select %p130, %s131, %s132
      %p136 = pneg %p130
      %p137 = scmp.eq.s32.totalorder %s11, 1
      %p138 = por %p136, %p137
      %p139 = scmp.ne.s32.totalorder %s131, %s134
      %p140 = scmp.eq.s32.totalorder %s11, 0
      %p141 = por %p139, %p140
      %p142 = scmp.ne.s32.totalorder %s131, %s134
      %p143 = scmp.eq.s32.totalorder %s16, 1
      %p144 = por %p142, %p143
      %p145 = scmp.ne.s32.totalorder %s134, %s135
      %p146 = scmp.eq.s32.totalorder %s16, 0
      %p147 = por %p145, %p146
      %p148 = scmp.ne.s32.totalorder %s134, %s135
      %p149 = scmp.eq.s32.totalorder %s17, 1
      %p150 = por %p148, %p149
      %p152 = scmp.ne.s32.totalorder %s135, %s151
      %p153 = scmp.eq.s32.totalorder %s17, 0
      %p154 = por %p152, %p153
      %p155 = scmp.le.s32.totalorder 1, %s11
      %p156 = scmp.lt.s32.totalorder %s11, 3
      %p157 = pnand %p155, %p156
      %p158 = pneg %p157
      // Predicated region
      $region9: #{unet_innermost_forward.2} parent=5 // pred_check
        _
      $region10: #{unet_innermost_forward.2} parent=5 // pred_check_branch
        %160 = sbr.rel (%p157) target = $region12
      $region11: #{unet_innermost_forward.2} parent=5 // pred_region
        %s161 = ssub.s32 %s11, 1
        // Predicated region
        $region13: #{unet_innermost_forward.2} parent=11 // pred_check
          %p162 = pneg %p58
        $region14: #{unet_innermost_forward.2} parent=11 // pred_check_branch
          %164 = sbr.rel (%p162) target = $region16
        $region15: #{unet_innermost_forward.2} parent=11 // pred_region
          _
        $region16: #{unet_innermost_forward.2} parent=11 // pred_fallthru
          _
        // Predicated region
        $region17: #{unet_innermost_forward.2} parent=11 // pred_check
          %p165 = pneg %p79
        $region18: #{unet_innermost_forward.2} parent=11 // pred_check_branch
          %167 = sbr.rel (%p165) target = $region20
        $region19: #{unet_innermost_forward.2} parent=11 // pred_region
          _
        $region20: #{unet_innermost_forward.2} parent=11 // pred_fallthru
          _
        // Predicated region
        $region21: #{unet_innermost_forward.2} parent=11 // pred_check
          %p168 = pneg %p100
        $region22: #{unet_innermost_forward.2} parent=11 // pred_check_branch
          %170 = sbr.rel (%p168) target = $region24
        $region23: #{unet_innermost_forward.2} parent=11 // pred_region
          _
        $region24: #{unet_innermost_forward.2} parent=11 // pred_fallthru
          _
        // Predicated region
        $region25: #{unet_innermost_forward.2} parent=11 // pred_check
          %p171 = pneg %p121
        $region26: #{unet_innermost_forward.2} parent=11 // pred_check_branch
          %173 = sbr.rel (%p171) target = $region28
        $region27: #{unet_innermost_forward.2} parent=11 // pred_region
          _
        $region28: #{unet_innermost_forward.2} parent=11 // pred_fallthru
          _
      $region12: #{unet_innermost_forward.2} parent=5 // pred_fallthru
        _
      %p174 = scmp.lt.s32.totalorder %s11, 2
      // Predicated region
      $region29: #{unet_innermost_forward.2} parent=5 // pred_check
        %p175 = pneg %p174
      $region30: #{unet_innermost_forward.2} parent=5 // pred_check_branch
        %177 = sbr.rel (%p175) target = $region32
      $region31: #{unet_innermost_forward.2} parent=5 // pred_region
        // Predicated region
        $region33: #{unet_innermost_forward.2} parent=31 // pred_check
          %p178 = pneg %p31
        $region34: #{unet_innermost_forward.2} parent=31 // pred_check_branch
          %180 = sbr.rel (%p178) target = $region36
        $region35: #{unet_innermost_forward.2} parent=31 // pred_region
          %s181 = sand.u32 %s21, 1
          %s182 = sand.u32 %s21, 1
          %s183 = smul.addr %s182, 48
          %s184 = scalar_lea.vmem [#allocation2], %s183
          %s185 = smul.addr %s11, 3
          %s186 = smul.addr %s185, 4
          %s187 = scalar_lea.vmem %s0, %s186
          // Predicated region
          $region37: #{unet_innermost_forward.2} parent=35 // pred_check
            _
          $region38: #{unet_innermost_forward.2} parent=35 // pred_check_branch
            %189 = sbr.rel (0) target = $region40
          $region39: #{unet_innermost_forward.2} parent=35 // pred_region
            // Predicated region
            $region41: #{unet_innermost_forward.2} parent=39 // pred_check
              _
            $region42: #{unet_innermost_forward.2} parent=39 // pred_check_branch
              %191 = sbr.rel (0) target = $region44
            $region43: #{unet_innermost_forward.2} parent=39 // pred_region
              %s192 = scalar_lea.vmem %s187, 8
              %s193 = scalar_lea.vmem %s184, 8 [#allocation2]
              loop: start=0, step=1, limit=1
              $region45: #{unet_innermost_forward.2} parent=43 // loop_pre_header
                _
              $region46: #{unet_innermost_forward.2} parent=43 // loop_header
                %s195 = sphi 0, %s199
                %p196 = scmp.ge.s32.totalorder %s195, 1
                %s200 = sphi %s187, %s187
                %s201 = sphi %s184, %s184
              $region47: #{unet_innermost_forward.2} parent=43 // loop_header_branch
                %198 = sbr.rel (%p196) target = $region51
              $region48: #{unet_innermost_forward.2} parent=43 // loop_body
                %v202 = vld [vmem:[%s200] sm:$0xff]
                %203 = vst [vmem:[%s201] sm:$0xff] %v202
                %v204 = vld [vmem:[%s200 + $0x18] sm:$0xff]
                %205 = vst [vmem:[%s201 + $0xc] sm:$0xff] %v204
                %v206 = vld [vmem:[%s200 + $0x30] sm:$0xff]
                %207 = vst [vmem:[%s201 + $0x18] sm:$0xff] %v206
                %v208 = vld [vmem:[%s200 + $0x48] sm:$0xff]
                %209 = vst [vmem:[%s201 + $0x24] sm:$0xff] %v208
              $region49: #{unet_innermost_forward.2} parent=43 // loop_footer
                %s199 = sadd.s32 1, %s195
              $region50: #{unet_innermost_forward.2} parent=43 // loop_footer_branch
                %194 = sbr.rel target = $region46
              $region51: #{unet_innermost_forward.2} parent=43 // loop_exit
                _
              %s211 = ssub.s32 16, 1
              loop: start=0, step=1, limit=1
              $region52: #{unet_innermost_forward.2} parent=43 // loop_pre_header
                _
              $region53: #{unet_innermost_forward.2} parent=43 // loop_header
                %s213 = sphi 0, %s217
                %p214 = scmp.ge.s32.totalorder %s213, 1
                %s218 = sphi %s192, %s192
                %s219 = sphi %s193, %s193
              $region54: #{unet_innermost_forward.2} parent=43 // loop_header_branch
                %216 = sbr.rel (%p214) target = $region58
              $region55: #{unet_innermost_forward.2} parent=43 // loop_body
                %v220 = vld [vmem:[%s218] sm:%s211]
                %221 = vst [vmem:[%s219] sm:%s211] %v220
                %v222 = vld [vmem:[%s218 + $0x18] sm:%s211]
                %223 = vst [vmem:[%s219 + $0xc] sm:%s211] %v222
                %v224 = vld [vmem:[%s218 + $0x30] sm:%s211]
                %225 = vst [vmem:[%s219 + $0x18] sm:%s211] %v224
                %v226 = vld [vmem:[%s218 + $0x48] sm:%s211]
                %227 = vst [vmem:[%s219 + $0x24] sm:%s211] %v226
              $region56: #{unet_innermost_forward.2} parent=43 // loop_footer
                %s217 = sadd.s32 1, %s213
              $region57: #{unet_innermost_forward.2} parent=43 // loop_footer_branch
                %212 = sbr.rel target = $region53
              $region58: #{unet_innermost_forward.2} parent=43 // loop_exit
                _
            $region44: #{unet_innermost_forward.2} parent=39 // pred_fallthru
              _
          $region40: #{unet_innermost_forward.2} parent=35 // pred_fallthru
            _
          %228 = vnop
        $region36: #{unet_innermost_forward.2} parent=31 // pred_fallthru
          _
      $region32: #{unet_innermost_forward.2} parent=5 // pred_fallthru
        _
      %p229 = scmp.le.s32.totalorder 1, %s11
      %p230 = scmp.lt.s32.totalorder %s11, 3
      %p231 = pnand %p229, %p230
      %p232 = pneg %p231
      // Predicated region
      $region59: #{unet_innermost_forward.2} parent=5 // pred_check
        _
      $region60: #{unet_innermost_forward.2} parent=5 // pred_check_branch
        %234 = sbr.rel (%p231) target = $region62
      $region61: #{unet_innermost_forward.2} parent=5 // pred_region
        %s235 = ssub.s32 %s11, 1
        %s236 = sand.u32 %s24, 1
        %s237 = sand.u32 %s24, 1
        %s238 = smul.addr %s237, 48
        %s239 = scalar_lea.vmem [#allocation2], %s238
        // Predicated region
        $region63: #{unet_innermost_forward.2} parent=61 // pred_check
          %p240 = pneg %p37
        $region64: #{unet_innermost_forward.2} parent=61 // pred_check_branch
          %242 = sbr.rel (%p240) target = $region66
        $region65: #{unet_innermost_forward.2} parent=61 // pred_region
          _
        $region66: #{unet_innermost_forward.2} parent=61 // pred_fallthru
          _
        %s243 = sand.u32 %s24, 1
        %s244 = sand.u32 %s24, 1
        %s245 = smul.addr %s244, 48
        %s246 = scalar_lea.vmem [#allocation2], %s245
        %p247 = pneg %p37
        %p248 = pneg %p34
        %p249 = pneg %p58
        %p250 = pneg %p55
        %p251 = pneg %p79
        %p252 = pneg %p76
        %p253 = pneg %p100
        %p254 = pneg %p97
        %p255 = pneg %p121
        %p256 = pneg %p118
        %p257 = pneg %p147
        %p258 = pneg %p144
        %p259 = scmp.lt.s32.totalorder %s16, 1
        %s260 = scalar_select %p259, %s16, 1
        %s261 = smul.addr %s260, 2
        %s262 = smul.addr %s261, 4
        %s263 = scalar_lea.vmem %s5, %s262
        %p264 = scmp.lt.s32.totalorder %s16, 1
        %s265 = scalar_select %p264, %s16, 1
        %s266 = smul.addr %s265, 2
        %s267 = smul.addr %s266, 4
        %s268 = scalar_lea.vmem %s5, %s267
        %v270 = vld [vmem:[%s239] sm:$0xff]
        %v271 = vld [vmem:[%s239 + $0x8] sm:$0xf]
        %v272 = vunpack.c.l.bf16 %v270
        %v273 = vunpack.c.h.bf16 %v270
        %v274 = vunpack.c.l.bf16 %v271
        %vm275 = vcmp.ge.f32.partialorder %v272, 0.0
        %vm276 = vcmp.ge.f32.partialorder %v273, 0.0
        %vm277 = vcmp.ge.f32.partialorder %v274, 0.0
        %v278 = vmul.f32 %v272, 0.2
        %v279 = vmul.f32 %v273, 0.2
        %v280 = vmul.f32 %v274, 0.2
        %v281 = vsel %vm275, %v272, %v278
        %v282 = vsel %vm276, %v273, %v279
        %v283 = vsel %vm277, %v274, %v280
        %s284 = scalar_lea.vmem %s239, 12 [#allocation2]
        %v285 = vld [vmem:[%s284] sm:$0xff]
        %v286 = vld [vmem:[%s284 + $0x8] sm:$0xf]
        %v287 = vunpack.c.l.bf16 %v285
        %v288 = vunpack.c.h.bf16 %v285
        %v289 = vunpack.c.l.bf16 %v286
        %vm290 = vcmp.ge.f32.partialorder %v287, 0.0
        %vm291 = vcmp.ge.f32.partialorder %v288, 0.0
        %vm292 = vcmp.ge.f32.partialorder %v289, 0.0
        %v293 = vmul.f32 %v287, 0.2
        %v294 = vmul.f32 %v288, 0.2
        %v295 = vmul.f32 %v289, 0.2
        %v296 = vsel %vm290, %v287, %v293
        %v297 = vsel %vm291, %v288, %v294
        %v298 = vsel %vm292, %v289, %v295
        %s299 = scalar_lea.vmem %s239, 24 [#allocation2]
        %v300 = vld [vmem:[%s299] sm:$0xff]
        %v301 = vld [vmem:[%s299 + $0x8] sm:$0xf]
        %v302 = vunpack.c.l.bf16 %v300
        %v303 = vunpack.c.h.bf16 %v300
        %v304 = vunpack.c.l.bf16 %v301
        %vm305 = vcmp.ge.f32.partialorder %v302, 0.0
        %vm306 = vcmp.ge.f32.partialorder %v303, 0.0
        %vm307 = vcmp.ge.f32.partialorder %v304, 0.0
        %v308 = vmul.f32 %v302, 0.2
        %v309 = vmul.f32 %v303, 0.2
        %v310 = vmul.f32 %v304, 0.2
        %v311 = vsel %vm305, %v302, %v308
        %v312 = vsel %vm306, %v303, %v309
        %v313 = vsel %vm307, %v304, %v310
        %s314 = scalar_lea.vmem %s239, 36 [#allocation2]
        %v315 = vld [vmem:[%s314] sm:$0xff]
        %v316 = vld [vmem:[%s314 + $0x8] sm:$0xf]
        %v317 = vunpack.c.l.bf16 %v315
        %v318 = vunpack.c.h.bf16 %v315
        %v319 = vunpack.c.l.bf16 %v316
        %vm320 = vcmp.ge.f32.partialorder %v317, 0.0
        %vm321 = vcmp.ge.f32.partialorder %v318, 0.0
        %vm322 = vcmp.ge.f32.partialorder %v319, 0.0
        %v323 = vmul.f32 %v317, 0.2
        %v324 = vmul.f32 %v318, 0.2
        %v325 = vmul.f32 %v319, 0.2
        %v326 = vsel %vm320, %v317, %v323
        %v327 = vsel %vm321, %v318, %v324
        %v328 = vsel %vm322, %v319, %v325
        %332 = vrot.lane.b32.xlu0 %v311, 127
        %v333 = vpop.permute.xlu0 %332
        %334 = vrot.lane.b32.xlu0 %v312, 127
        %v335 = vpop.permute.xlu0 %334
        %336 = vrot.lane.b32.xlu0 %v313, 127
        %v337 = vpop.permute.xlu0 %336
        %vm338 = vcmask 1039360
        %v339 = vsel %vm338, %v333, %v335
        %v340 = vsel %vm338, %v335, %v337
        %346 = vrot.lane.b32.xlu0 %v326, 127
        %v347 = vpop.permute.xlu0 %346
        %348 = vrot.lane.b32.xlu0 %v327, 127
        %v349 = vpop.permute.xlu0 %348
        %350 = vrot.lane.b32.xlu0 %v328, 127
        %v351 = vpop.permute.xlu0 %350
        %v352 = vsel %vm338, %v347, %v349
        %v353 = vsel %vm338, %v349, %v351
        %356 = vrot.lane.b32.xlu0 %v311, 126
        %v357 = vpop.permute.xlu0 %356
        %358 = vrot.lane.b32.xlu0 %v312, 126
        %v359 = vpop.permute.xlu0 %358
        %360 = vrot.lane.b32.xlu0 %v313, 126
        %v361 = vpop.permute.xlu0 %360
        %vm362 = vcmask 1031168
        %v363 = vsel %vm362, %v357, %v359
        %v364 = vsel %vm362, %v359, %v361
        %370 = vrot.lane.b32.xlu0 %v296, 118
        %v371 = vpop.permute.xlu0 %370
        %372 = vrot.lane.b32.xlu0 %v297, 118
        %v373 = vpop.permute.xlu0 %372
        %374 = vrot.lane.b32.xlu0 %v298, 118
        %v375 = vpop.permute.xlu0 %374
        %vm376 = vcmask 965632
        %v377 = vsel %vm376, %v371, %v373
        %v378 = vsel %vm376, %v373, %v375
        %384 = vrot.lane.b32.xlu0 %v281, 117
        %v385 = vpop.permute.xlu0 %384
        %386 = vrot.lane.b32.xlu0 %v282, 117
        %v387 = vpop.permute.xlu0 %386
        %388 = vrot.lane.b32.xlu0 %v283, 117
        %v389 = vpop.permute.xlu0 %388
        %vm390 = vcmask 957440
        %v391 = vsel %vm390, %v385, %v387
        %v392 = vsel %vm390, %v387, %v389
        %395 = vrot.lane.b32.xlu0 %v296, 117
        %v396 = vpop.permute.xlu0 %395
        %397 = vrot.lane.b32.xlu0 %v297, 117
        %v398 = vpop.permute.xlu0 %397
        %399 = vrot.lane.b32.xlu0 %v298, 117
        %v400 = vpop.permute.xlu0 %399
        %v401 = vsel %vm390, %v396, %v398
        %v402 = vsel %vm390, %v398, %v400
        %405 = vrot.lane.b32.xlu0 %v281, 116
        %v406 = vpop.permute.xlu0 %405
        %407 = vrot.lane.b32.xlu0 %v282, 116
        %v408 = vpop.permute.xlu0 %407
        %409 = vrot.lane.b32.xlu0 %v283, 116
        %v410 = vpop.permute.xlu0 %409
        %vm411 = vcmask 949248
        %v412 = vsel %vm411, %v406, %v408
        %v413 = vsel %vm411, %v408, %v410
        %416 = vrot.lane.b32.xlu0 %v326, 118
        %v417 = vpop.permute.xlu0 %416
        %418 = vrot.lane.b32.xlu0 %v327, 118
        %v419 = vpop.permute.xlu0 %418
        %420 = vrot.lane.b32.xlu0 %v328, 118
        %v421 = vpop.permute.xlu0 %420
        %v422 = vsel %vm376, %v417, %v419
        %v423 = vsel %vm376, %v419, %v421
        %426 = vrot.lane.b32.xlu0 %v311, 117
        %v427 = vpop.permute.xlu0 %426
        %428 = vrot.lane.b32.xlu0 %v312, 117
        %v429 = vpop.permute.xlu0 %428
        %430 = vrot.lane.b32.xlu0 %v313, 117
        %v431 = vpop.permute.xlu0 %430
        %v432 = vsel %vm390, %v427, %v429
        %v433 = vsel %vm390, %v429, %v431
        %436 = vrot.lane.b32.xlu0 %v326, 117
        %v437 = vpop.permute.xlu0 %436
        %438 = vrot.lane.b32.xlu0 %v327, 117
        %v439 = vpop.permute.xlu0 %438
        %440 = vrot.lane.b32.xlu0 %v328, 117
        %v441 = vpop.permute.xlu0 %440
        %v442 = vsel %vm390, %v437, %v439
        %v443 = vsel %vm390, %v439, %v441
        %446 = vrot.lane.b32.xlu0 %v311, 116
        %v447 = vpop.permute.xlu0 %446
        %448 = vrot.lane.b32.xlu0 %v312, 116
        %v449 = vpop.permute.xlu0 %448
        %450 = vrot.lane.b32.xlu0 %v313, 116
        %v451 = vpop.permute.xlu0 %450
        %v452 = vsel %vm411, %v447, %v449
        %v453 = vsel %vm411, %v449, %v451
        %456 = vrot.lane.b32.xlu0 %v296, 108
        %v457 = vpop.permute.xlu0 %456
        %458 = vrot.lane.b32.xlu0 %v297, 108
        %v459 = vpop.permute.xlu0 %458
        %460 = vrot.lane.b32.xlu0 %v298, 108
        %v461 = vpop.permute.xlu0 %460
        %vm462 = vcmask 883712
        %v463 = vsel %vm462, %v457, %v459
        %v464 = vsel %vm462, %v459, %v461
        %467 = vrot.lane.b32.xlu0 %v281, 107
        %v468 = vpop.permute.xlu0 %467
        %469 = vrot.lane.b32.xlu0 %v282, 107
        %v470 = vpop.permute.xlu0 %469
        %471 = vrot.lane.b32.xlu0 %v283, 107
        %v472 = vpop.permute.xlu0 %471
        %vm473 = vcmask 875520
        %v474 = vsel %vm473, %v468, %v470
        %v475 = vsel %vm473, %v470, %v472
        %478 = vrot.lane.b32.xlu0 %v296, 107
        %v479 = vpop.permute.xlu0 %478
        %480 = vrot.lane.b32.xlu0 %v297, 107
        %v481 = vpop.permute.xlu0 %480
        %482 = vrot.lane.b32.xlu0 %v298, 107
        %v483 = vpop.permute.xlu0 %482
        %v484 = vsel %vm473, %v479, %v481
        %v485 = vsel %vm473, %v481, %v483
        %488 = vrot.lane.b32.xlu0 %v281, 106
        %v489 = vpop.permute.xlu0 %488
        %490 = vrot.lane.b32.xlu0 %v282, 106
        %v491 = vpop.permute.xlu0 %490
        %492 = vrot.lane.b32.xlu0 %v283, 106
        %v493 = vpop.permute.xlu0 %492
        %vm494 = vcmask 867328
        %v495 = vsel %vm494, %v489, %v491
        %v496 = vsel %vm494, %v491, %v493
        %v499 = vpack.c.bf16 %v339, %v326
        %v500 = vpack.c.bf16 %v340, %v327
        %v501 = vpack.c.bf16 %v363, %v352
        %v502 = vpack.c.bf16 %v364, %v353
        %v503 = vpack.c.bf16 %v391, %v377
        %v504 = vpack.c.bf16 %v392, %v378
        %v505 = vpack.c.bf16 %v412, %v401
        %v506 = vpack.c.bf16 %v413, %v402
        %v507 = vpack.c.bf16 %v432, %v422
        %v508 = vpack.c.bf16 %v433, %v423
        %v509 = vpack.c.bf16 %v452, %v442
        %v510 = vpack.c.bf16 %v453, %v443
        %v511 = vpack.c.bf16 %v474, %v463
        %v512 = vpack.c.bf16 %v475, %v464
        %v513 = vpack.c.bf16 %v495, %v484
        %v514 = vpack.c.bf16 %v496, %v485
        %v515 = vld [vmem:[%s1] sm:$0xf]
        %516 = vmatprep.subr.bf16.mxu0 %v514
        %517 = vmatpush1.bf16.msra.mxu0 %v513
        %518 = vmatprep.subr.bf16.mxu0 %v512
        %519 = vmatpush1.bf16.msra.mxu0 %v511
        %520 = vmatprep.subr.bf16.mxu0 %v510
        %521 = vmatpush1.bf16.msra.mxu0 %v509
        %522 = vmatprep.subr.bf16.mxu0 %v508
        %523 = vmatpush1.bf16.msra.mxu0 %v507
        %524 = vmatprep.subr.bf16.mxu0 %v506
        %525 = vmatpush1.bf16.msra.mxu0 %v505
        %526 = vmatprep.subr.bf16.mxu0 %v504
        %527 = vmatpush1.bf16.msra.mxu0 %v503
        %528 = vmatprep.subr.bf16.mxu0 %v502
        %529 = vmatpush1.bf16.msra.mxu0 %v501
        %530 = vmatprep.subr.bf16.mxu0 %v500
        %531 = vmatpush1.bf16.msra.mxu0 %v499
        %532 = vmatprep.subr.bf16.mxu0 0
        %533 = vmatpush2.bf16.msra.mxu0 0
        %534 = vmatprep.subr.bf16.mxu0 0
        %535 = vmatpush2.bf16.msra.mxu0 0
        %536 = vmatprep.subr.bf16.mxu0 0
        %537 = vmatpush2.bf16.msra.mxu0 0
        %538 = vmatprep.subr.bf16.mxu0 0
        %539 = vmatpush2.bf16.msra.mxu0 0
        %540 = vmatprep.subr.bf16.mxu0 0
        %541 = vmatpush2.bf16.msra.mxu0 0
        %542 = vmatprep.subr.bf16.mxu0 0
        %543 = vmatpush2.bf16.msra.mxu0 0
        %544 = vmatprep.subr.bf16.mxu0 0
        %545 = vmatpush2.bf16.msra.mxu0 0
        %546 = vmatprep.subr.bf16.mxu0 0
        %547 = vmatpush2.bf16.msra.mxu0 0
        %548 = vmatprep.mubr.bf16.mxu0 0
        %549 = vmatmul.mubr.bf16.gmra.mxu0 %v515
        %v550 = vpop.f32.mrf.mxu0
        %v551 = vadd.f32 0.0, %v550
        %v552 = vpop.f32.mrf.mxu0
        %v553 = vadd.f32 0.0, %v552
        %v554 = vpop.f32.mrf.mxu0
        %v555 = vpop.f32.mrf.mxu0
        %556 = vdwg.mxu0
        %v557 = vmax.f32 %v551, 0.0
        %v558 = vmax.f32 %v553, 0.0
        %v559 = vld [vmem:[%s3] sm:$0x3]
        %v561 = vlaneseq
        %v562 = vshrl.u32 %v561, 7
        %v563 = vsub.s32 0, %v562
        %v564 = vrot.slane %v559, %v563
        %v565 = vlaneseq
        %v566 = vshrl.u32 %v565, 7
        %v567 = vsub.s32 1, %v566
        %v568 = vrot.slane %v559, %v567
        %v571 = vmul.f32 %v557, %v564
        %v572 = vmul.f32 %v558, %v568
        %575 = vrot.lane.b32.xlu0 %v571, 1
        %v576 = vpop.permute.xlu0 %575
        %577 = vrot.lane.b32.xlu0 %v572, 1
        %v578 = vpop.permute.xlu0 %577
        %vm579 = vcmask 7168
        %v580 = vsel %vm579, %v576, %v578
        %583 = vrot.lane.b32.xlu0 %v571, 10
        %v584 = vpop.permute.xlu0 %583
        %585 = vrot.lane.b32.xlu0 %v572, 10
        %v586 = vpop.permute.xlu0 %585
        %vm587 = vcmask 80896
        %v588 = vsel %vm587, %v584, %v586
        %591 = vrot.lane.b32.xlu0 %v571, 11
        %v592 = vpop.permute.xlu0 %591
        %594 = vrot.lane.b32.xlu0 %v571, 127
        %v595 = vpop.permute.xlu0 %594
        %596 = vrot.lane.b32.xlu0 %v572, 127
        %v597 = vpop.permute.xlu0 %596
        %v598 = vsel %vm338, %v595, %v597
        %601 = vrot.lane.b32.xlu0 %v571, 9
        %v602 = vpop.permute.xlu0 %601
        %603 = vrot.lane.b32.xlu0 %v572, 9
        %v604 = vpop.permute.xlu0 %603
        %vm605 = vcmask 72704
        %v606 = vsel %vm605, %v602, %v604
        %609 = vrot.lane.b32.xlu0 %v571, 118
        %v610 = vpop.permute.xlu0 %609
        %611 = vrot.lane.b32.xlu0 %v572, 118
        %v612 = vpop.permute.xlu0 %611
        %v613 = vsel %vm376, %v610, %v612
        %616 = vrot.lane.b32.xlu0 %v571, 119
        %v617 = vpop.permute.xlu0 %616
        %618 = vrot.lane.b32.xlu0 %v572, 119
        %v619 = vpop.permute.xlu0 %618
        %vm620 = vcmask 973824
        %v621 = vsel %vm620, %v617, %v619
        %624 = vrot.lane.b32.xlu0 %v571, 117
        %v625 = vpop.permute.xlu0 %624
        %626 = vrot.lane.b32.xlu0 %v572, 117
        %v627 = vpop.permute.xlu0 %626
        %v628 = vsel %vm390, %v625, %v627
        %v631 = vpack.c.bf16 %v576, %v571
        %v632 = vpack.c.bf16 %v580, %v572
        %v633 = vpack.c.bf16 %v592, %v584
        %v634 = vpack.c.bf16 %v592, %v588
        %v635 = vpack.c.bf16 %v598, %v571
        %v636 = vpack.c.bf16 %v597, %v572
        %v637 = vpack.c.bf16 %v602, %v584
        %v638 = vpack.c.bf16 %v606, %v588
        %v639 = vpack.c.bf16 %v621, %v613
        %v640 = vpack.c.bf16 %v619, %v612
        %v641 = vpack.c.bf16 %v628, %v613
        %v642 = vpack.c.bf16 %v627, %v612
        %v643 = vld [vmem:[%s2] sm:$0xf]
        %v644 = vld [vmem:[%s2 + $0x4] sm:$0xf]
        %v647 = vunpack.c.l.b16 %v643
        %v648 = vunpack.c.l.b16 %v644
        %v649 = vpack.c.b16 %v648, %v647
        %663 = vrot.lane.b32.xlu0 %v631, 117
        %v664 = vpop.permute.xlu0 %663
        %665 = vrot.lane.b32.xlu0 %v632, 117
        %v666 = vpop.permute.xlu0 %665
        %667 = vrot.lane.b32.xlu0 %v633, 117
        %v668 = vpop.permute.xlu0 %667
        %669 = vrot.lane.b32.xlu0 %v634, 117
        %v670 = vpop.permute.xlu0 %669
        %671 = vrot.lane.b32.xlu0 %v635, 117
        %v672 = vpop.permute.xlu0 %671
        %673 = vrot.lane.b32.xlu0 %v636, 117
        %v674 = vpop.permute.xlu0 %673
        %675 = vrot.lane.b32.xlu0 %v637, 117
        %v676 = vpop.permute.xlu0 %675
        %677 = vrot.lane.b32.xlu0 %v638, 117
        %v678 = vpop.permute.xlu0 %677
        %679 = vrot.lane.b32.xlu0 %v639, 117
        %v680 = vpop.permute.xlu0 %679
        %681 = vrot.lane.b32.xlu0 %v640, 117
        %v682 = vpop.permute.xlu0 %681
        %683 = vrot.lane.b32.xlu0 %v641, 117
        %v684 = vpop.permute.xlu0 %683
        %685 = vrot.lane.b32.xlu0 %v642, 117
        %v686 = vpop.permute.xlu0 %685
        %vm687 = vcmask 957440
        %v688 = vsel %vm687, %v664, %v666
        %v689 = vsel %vm687, %v668, %v670
        %v690 = vsel %vm687, %v672, %v674
        %v691 = vsel %vm687, %v676, %v678
        %v692 = vsel %vm687, %v680, %v682
        %v693 = vsel %vm687, %v684, %v686
        %700 = vmatprep.subr.bf16.mxu0 0
        %701 = vmatpush1.bf16.msra.mxu0 %v693
        %702 = vmatprep.subr.bf16.mxu0 0
        %703 = vmatpush1.bf16.msra.mxu0 %v690
        %704 = vmatprep.subr.bf16.mxu0 0
        %705 = vmatpush1.bf16.msra.mxu0 %v692
        %706 = vmatprep.subr.bf16.mxu0 0
        %707 = vmatpush1.bf16.msra.mxu0 %v688
        %708 = vmatprep.subr.bf16.mxu0 0
        %709 = vmatpush1.bf16.msra.mxu0 %v691
        %710 = vmatprep.subr.bf16.mxu0 0
        %711 = vmatpush1.bf16.msra.mxu0 %v690
        %712 = vmatprep.subr.bf16.mxu0 0
        %713 = vmatpush1.bf16.msra.mxu0 %v689
        %714 = vmatprep.subr.bf16.mxu0 0
        %715 = vmatpush1.bf16.msra.mxu0 %v688
        %716 = vmatprep.subr.bf16.mxu0 0
        %717 = vmatpush2.bf16.msra.mxu0 0
        %718 = vmatprep.subr.bf16.mxu0 0
        %719 = vmatpush2.bf16.msra.mxu0 0
        %720 = vmatprep.subr.bf16.mxu0 0
        %721 = vmatpush2.bf16.msra.mxu0 0
        %722 = vmatprep.subr.bf16.mxu0 0
        %723 = vmatpush2.bf16.msra.mxu0 0
        %724 = vmatprep.subr.bf16.mxu0 0
        %725 = vmatpush2.bf16.msra.mxu0 0
        %726 = vmatprep.subr.bf16.mxu0 0
        %727 = vmatpush2.bf16.msra.mxu0 0
        %728 = vmatprep.subr.bf16.mxu0 0
        %729 = vmatpush2.bf16.msra.mxu0 0
        %730 = vmatprep.subr.bf16.mxu0 0
        %731 = vmatpush2.bf16.msra.mxu0 0
        %732 = vmatprep.mubr.bf16.mxu0 0
        %733 = vmatmul.mubr.bf16.gmra.mxu0 %v649
        %v734 = vpop.f32.mrf.mxu0
        %v735 = vadd.f32 0.0, %v734
        %v736 = vpop.f32.mrf.mxu0
        %v737 = vpop.f32.mrf.mxu0
        %v738 = vadd.f32 0.0, %v737
        %v739 = vpop.f32.mrf.mxu0
        %740 = vdwg.mxu0
        %v741 = vld [vmem:[%s4] sm:$0x1]
        %v743 = vlaneseq
        %v744 = vshrl.u32 %v743, 7
        %v745 = vsub.s32 0, %v744
        %v746 = vrot.slane %v741, %v745
        %v748 = vmul.f32 %v735, %v746
        %v749 = vmul.f32 %v738, %v746
        %v750 = vpack.c.bf16 %v749, %v748
        %v752 = vunpack.c.l.b16 %v750
        %v753 = vunpack.c.h.b16 %v750
        %v754 = vpack.c.b16 %v752, %v752
        %v755 = vpack.c.b16 %v753, %v753
        %758 = vst [vmem:[%s268] sm:$0xf] %v754
        %759 = vst [vmem:[%s268 + $0x4] sm:$0xf] %v755
        %p760 = scmp.lt.s32.totalorder %s16, 1
        %s761 = scalar_select %p760, %s16, 1
        %s762 = smul.addr %s761, 2
        %s763 = smul.addr %s762, 4
        %s764 = scalar_lea.vmem %s5, %s763
        // Predicated region
        $region67: #{unet_innermost_forward.2} parent=61 // pred_check
          %p765 = pneg %p144
        $region68: #{unet_innermost_forward.2} parent=61 // pred_check_branch
          %767 = sbr.rel (%p765) target = $region70
        $region69: #{unet_innermost_forward.2} parent=61 // pred_region
          _
        $region70: #{unet_innermost_forward.2} parent=61 // pred_fallthru
          _
      $region62: #{unet_innermost_forward.2} parent=5 // pred_fallthru
        _
      %p768 = scmp.le.s32.totalorder 2, %s11
      // Predicated region
      $region71: #{unet_innermost_forward.2} parent=5 // pred_check
        %p769 = pneg %p768
      $region72: #{unet_innermost_forward.2} parent=5 // pred_check_branch
        %771 = sbr.rel (%p769) target = $region74
      $region73: #{unet_innermost_forward.2} parent=5 // pred_region
        %s772 = ssub.s32 %s11, 2
        // Predicated region
        $region75: #{unet_innermost_forward.2} parent=73 // pred_check
          %p773 = pneg %p150
        $region76: #{unet_innermost_forward.2} parent=73 // pred_check_branch
          %775 = sbr.rel (%p773) target = $region78
        $region77: #{unet_innermost_forward.2} parent=73 // pred_region
          %p776 = scmp.lt.s32.totalorder %s17, 1
          %s777 = scalar_select %p776, %s17, 1
          %s778 = smul.addr %s777, 2
          %s779 = smul.addr %s778, 4
          %s780 = scalar_lea.vmem %s5, %s779
        $region78: #{unet_innermost_forward.2} parent=73 // pred_fallthru
          _
      $region74: #{unet_innermost_forward.2} parent=5 // pred_fallthru
        _
    $region6: #{unet_innermost_forward.2} parent=1 // loop_footer
      %s15 = sadd.s32 1, %s11
    $region7: #{unet_innermost_forward.2} parent=1 // loop_footer_branch
      %10 = sbr.rel target = $region3
    $region8: #{unet_innermost_forward.2} parent=1 // loop_exit
      _

// kernel: unet_innermost_forward.3
$region0: #{unet_innermost_forward.3}
  #allocation0 [shape = 'u32[]', space=smem, size = 0x4, offset = 0x4, fixed_abs, tag = 'smem constant byte address 0x4 - core index']
  #allocation1 [shape = 'u32[144,128]{1,0:T(1,128)}', space=vmem, size = 0x12000, scoped, tag = 'internal scratch']
  %s0 = inlined_call_operand.vmem [shape: f32[2,4,256], index: 0, kind: input, shape index: {}]
  %s1 = inlined_call_operand.vmem [shape: bf16[2,4,256], index: 1, kind: input, shape index: {}]
  %s2 = inlined_call_operand.vmem [shape: f32[4,2], index: 2, kind: input, shape index: {}]
  %s3 = inlined_call_operand.vmem [shape: f32[2,8,256], index: 3, kind: output, shape index: {}]
  %s4 = sld [smem:[#allocation0]]
  $region45: #{unet_innermost_forward.3} parent=0
    _
  %s6 = ssub.s32 1, %s4
  %s7 = scalar_select 0, %s6, %s4
  loop: start=0, step=1, limit=4
  $region2: #{unet_innermost_forward.3} parent=0 // loop_pre_header
    _
  $region3: #{unet_innermost_forward.3} parent=0 // loop_header
    %s9 = sphi 0, %s13
    %p10 = scmp.ge.s32.totalorder %s9, 4
    %s19 = sphi 0, %s21
    %s22 = sphi 0, %s19
    %s23 = sphi 0, %s22
    %s39 = sphi 0, %s23
    %s45 = sphi 0, %s47
    %s48 = sphi 0, %s45
    %s49 = sphi 0, %s48
    %s65 = sphi 0, %s49
    %s69 = sphi 0, %s69
    %s71 = sphi 0, %s69
    %s72 = sphi 0, %s71
    %s86 = sphi 0, %s72
    %s92 = sphi 0, %s94
    %s95 = sphi 0, %s92
    %s96 = sphi 0, %s95
    %s112 = sphi 0, %s96
  $region4: #{unet_innermost_forward.3} parent=0 // loop_header_branch
    %12 = sbr.rel (%p10) target = $region8
  $region5: #{unet_innermost_forward.3} parent=0 // loop_body
    %s14 = ssub.s32 %s9, 1
    %s15 = ssub.s32 %s9, 2
    %s16 = sadd.s32 %s9, 1
    %s17 = ssub.s32 %s9, %s16
    %p18 = scmp.eq.s32.totalorder %s17, 0
    %s20 = sadd.s32 %s19, 1
    %s21 = scalar_select %p18, %s19, %s20
    %p24 = pneg %p18
    %p25 = scmp.eq.s32.totalorder %s9, 1
    %p26 = por %p24, %p25
    %p27 = scmp.ne.s32.totalorder %s19, %s22
    %p28 = scmp.eq.s32.totalorder %s9, 0
    %p29 = por %p27, %p28
    %p30 = scmp.ne.s32.totalorder %s19, %s22
    %p31 = scmp.eq.s32.totalorder %s14, 1
    %p32 = por %p30, %p31
    %p33 = scmp.ne.s32.totalorder %s22, %s23
    %p34 = scmp.eq.s32.totalorder %s14, 0
    %p35 = por %p33, %p34
    %p36 = scmp.ne.s32.totalorder %s22, %s23
    %p37 = scmp.eq.s32.totalorder %s15, 1
    %p38 = por %p36, %p37
    %p40 = scmp.ne.s32.totalorder %s23, %s39
    %p41 = scmp.eq.s32.totalorder %s15, 0
    %p42 = por %p40, %p41
    %s43 = ssub.s32 %s9, %s16
    %p44 = scmp.eq.s32.totalorder %s43, 0
    %s46 = sadd.s32 %s45, 1
    %s47 = scalar_select %p44, %s45, %s46
    %p50 = pneg %p44
    %p51 = scmp.eq.s32.totalorder %s9, 1
    %p52 = por %p50, %p51
    %p53 = scmp.ne.s32.totalorder %s45, %s48
    %p54 = scmp.eq.s32.totalorder %s9, 0
    %p55 = por %p53, %p54
    %p56 = scmp.ne.s32.totalorder %s45, %s48
    %p57 = scmp.eq.s32.totalorder %s14, 1
    %p58 = por %p56, %p57
    %p59 = scmp.ne.s32.totalorder %s48, %s49
    %p60 = scmp.eq.s32.totalorder %s14, 0
    %p61 = por %p59, %p60
    %p62 = scmp.ne.s32.totalorder %s48, %s49
    %p63 = scmp.eq.s32.totalorder %s15, 1
    %p64 = por %p62, %p63
    %p66 = scmp.ne.s32.totalorder %s49, %s65
    %p67 = scmp.eq.s32.totalorder %s15, 0
    %p68 = por %p66, %p67
    %s70 = sadd.s32 %s69, 1
    %p73 = scmp.eq.s32.totalorder %s9, 1
    %p74 = scmp.ne.s32.totalorder %s69, %s71
    %p75 = scmp.eq.s32.totalorder %s9, 0
    %p76 = por %p74, %p75
    %p77 = scmp.ne.s32.totalorder %s69, %s71
    %p78 = scmp.eq.s32.totalorder %s14, 1
    %p79 = por %p77, %p78
    %p80 = scmp.ne.s32.totalorder %s71, %s72
    %p81 = scmp.eq.s32.totalorder %s14, 0
    %p82 = por %p80, %p81
    %p83 = scmp.ne.s32.totalorder %s71, %s72
    %p84 = scmp.eq.s32.totalorder %s15, 1
    %p85 = por %p83, %p84
    %p87 = scmp.ne.s32.totalorder %s72, %s86
    %p88 = scmp.eq.s32.totalorder %s15, 0
    %p89 = por %p87, %p88
    %s90 = ssub.s32 %s9, %s16
    %p91 = scmp.eq.s32.totalorder %s90, 0
    %s93 = sadd.s32 %s92, 1
    %s94 = scalar_select %p91, %s92, %s93
    %p97 = pneg %p91
    %p98 = scmp.eq.s32.totalorder %s9, 1
    %p99 = por %p97, %p98
    %p100 = scmp.ne.s32.totalorder %s92, %s95
    %p101 = scmp.eq.s32.totalorder %s9, 0
    %p102 = por %p100, %p101
    %p103 = scmp.ne.s32.totalorder %s92, %s95
    %p104 = scmp.eq.s32.totalorder %s14, 1
    %p105 = por %p103, %p104
    %p106 = scmp.ne.s32.totalorder %s95, %s96
    %p107 = scmp.eq.s32.totalorder %s14, 0
    %p108 = por %p106, %p107
    %p109 = scmp.ne.s32.totalorder %s95, %s96
    %p110 = scmp.eq.s32.totalorder %s15, 1
    %p111 = por %p109, %p110
    %p113 = scmp.ne.s32.totalorder %s96, %s112
    %p114 = scmp.eq.s32.totalorder %s15, 0
    %p115 = por %p113, %p114
    %p116 = scmp.le.s32.totalorder 1, %s9
    %p117 = scmp.lt.s32.totalorder %s9, 3
    %p118 = pnand %p116, %p117
    %p119 = pneg %p118
    // Predicated region
    $region9: #{unet_innermost_forward.3} parent=5 // pred_check
      _
    $region10: #{unet_innermost_forward.3} parent=5 // pred_check_branch
      %121 = sbr.rel (%p118) target = $region12
    $region11: #{unet_innermost_forward.3} parent=5 // pred_region
      %s122 = ssub.s32 %s9, 1
      // Predicated region
      $region13: #{unet_innermost_forward.3} parent=11 // pred_check
        %p123 = pneg %p82
      $region14: #{unet_innermost_forward.3} parent=11 // pred_check_branch
        %125 = sbr.rel (%p123) target = $region16
      $region15: #{unet_innermost_forward.3} parent=11 // pred_region
        _
      $region16: #{unet_innermost_forward.3} parent=11 // pred_fallthru
        _
    $region12: #{unet_innermost_forward.3} parent=5 // pred_fallthru
      _
    %p126 = scmp.lt.s32.totalorder %s9, 2
    // Predicated region
    $region17: #{unet_innermost_forward.3} parent=5 // pred_check
      %p127 = pneg %p126
    $region18: #{unet_innermost_forward.3} parent=5 // pred_check_branch
      %129 = sbr.rel (%p127) target = $region20
    $region19: #{unet_innermost_forward.3} parent=5 // pred_region
      // Predicated region
      $region21: #{unet_innermost_forward.3} parent=19 // pred_check
        %p130 = pneg %p29
      $region22: #{unet_innermost_forward.3} parent=19 // pred_check_branch
        %132 = sbr.rel (%p130) target = $region24
      $region23: #{unet_innermost_forward.3} parent=19 // pred_region
        %p133 = scmp.lt.s32.totalorder %s9, 1
        %s134 = scalar_select %p133, %s9, 1
        %s135 = smul.addr %s134, 2
        %s136 = smul.addr %s135, 4
        %s137 = scalar_lea.vmem %s0, %s136
      $region24: #{unet_innermost_forward.3} parent=19 // pred_fallthru
        _
      // Predicated region
      $region25: #{unet_innermost_forward.3} parent=19 // pred_check
        %p138 = pneg %p55
      $region26: #{unet_innermost_forward.3} parent=19 // pred_check_branch
        %140 = sbr.rel (%p138) target = $region28
      $region27: #{unet_innermost_forward.3} parent=19 // pred_region
        %p141 = scmp.lt.s32.totalorder %s9, 1
        %s142 = scalar_select %p141, %s9, 1
        %s143 = smul.addr %s142, 2
        %s144 = smul.addr %s143, 2
        %s145 = scalar_lea.vmem %s1, %s144
      $region28: #{unet_innermost_forward.3} parent=19 // pred_fallthru
        _
    $region20: #{unet_innermost_forward.3} parent=5 // pred_fallthru
      _
    %p146 = scmp.le.s32.totalorder 1, %s9
    %p147 = scmp.lt.s32.totalorder %s9, 3
    %p148 = pnand %p146, %p147
    %p149 = pneg %p148
    // Predicated region
    $region29: #{unet_innermost_forward.3} parent=5 // pred_check
      _
    $region30: #{unet_innermost_forward.3} parent=5 // pred_check_branch
      %151 = sbr.rel (%p148) target = $region32
    $region31: #{unet_innermost_forward.3} parent=5 // pred_region
      %s152 = ssub.s32 %s9, 1
      %p153 = scmp.lt.s32.totalorder %s14, 1
      %s154 = scalar_select %p153, %s14, 1
      %s155 = smul.addr %s154, 2
      %s156 = smul.addr %s155, 4
      %s157 = scalar_lea.vmem %s0, %s156
      %p158 = pneg %p35
      %p159 = pneg %p32
      %p160 = scmp.lt.s32.totalorder %s14, 1
      %s161 = scalar_select %p160, %s14, 1
      %s162 = smul.addr %s161, 2
      %s163 = smul.addr %s162, 2
      %s164 = scalar_lea.vmem %s1, %s163
      %p165 = pneg %p61
      %p166 = pneg %p58
      %p167 = pneg %p82
      %p168 = pneg %p79
      %p169 = pneg %p108
      %p170 = pneg %p105
      %p171 = scmp.lt.s32.totalorder %s14, 1
      %s172 = scalar_select %p171, %s14, 1
      %s173 = smul.addr %s172, 2
      %s174 = smul.addr %s173, 8
      %s175 = scalar_lea.vmem %s3, %s174
      %p176 = scmp.lt.s32.totalorder %s14, 1
      %s177 = scalar_select %p176, %s14, 1
      %s178 = smul.addr %s177, 2
      %s179 = smul.addr %s178, 4
      %s180 = scalar_lea.vmem %s0, %s179
      %p181 = scmp.lt.s32.totalorder %s14, 1
      %s182 = scalar_select %p181, %s14, 1
      %s183 = smul.addr %s182, 2
      %s184 = smul.addr %s183, 2
      %s185 = scalar_lea.vmem %s1, %s184
      %p186 = scmp.lt.s32.totalorder %s14, 1
      %s187 = scalar_select %p186, %s14, 1
      %s188 = smul.addr %s187, 2
      %s189 = smul.addr %s188, 8
      %s190 = scalar_lea.vmem %s3, %s189
      %v191 = vld [vmem:[%s180] sm:$0xff]
      %v193 = vcombine.high %v191, %v191
      %195 = vst [vmem:[%s190] sm:$0xf] %v191
      %196 = vst [vmem:[%s190 + $0x8] sm:$0xf] %v193
      %v197 = vld [vmem:[%s2] sm:$0xf]
      %v198 = vld [vmem:[%s185] sm:$0xf]
      %v199 = vunpack.c.l.bf16 %v198
      %201 = vset.pattern.permute.xlu0 0
      %202 = vperm.xlu0 %201, %v197
      %v203 = vpop.permute.xlu0 %202
      %v205 = vunpack.c.l.s4 839922192
      %v206 = vunpack.c.0.s8 %v205
      %v207 = vlaneseq
      %v208 = vshrl.u32 %v207, 7
      %v209 = vsub.s32 %v206, %v208
      %v210 = vrot.slane %v203, %v209
      %v212 = vmul.f32 %v199, %v210
      %213 = vset.pattern.permute.xlu0 1
      %214 = vperm.xlu0 %213, %v197
      %v215 = vpop.permute.xlu0 %214
      %v217 = vunpack.c.l.s4 839922192
      %v218 = vunpack.c.0.s8 %v217
      %v219 = vlaneseq
      %v220 = vshrl.u32 %v219, 7
      %v221 = vsub.s32 %v218, %v220
      %v222 = vrot.slane %v215, %v221
      %v224 = vadd.f32 %v212, %v222
      %v226 = vcombine.low %v224, %v224
      %228 = vst [vmem:[%s190] sm:$0xf0] %v226
      %229 = vst [vmem:[%s190 + $0x8] sm:$0xf0] %v224
      %p230 = scmp.lt.s32.totalorder %s14, 1
      %s231 = scalar_select %p230, %s14, 1
      %s232 = smul.addr %s231, 2
      %s233 = smul.addr %s232, 8
      %s234 = scalar_lea.vmem %s3, %s233
      // Predicated region
      $region33: #{unet_innermost_forward.3} parent=31 // pred_check
        %p235 = pneg %p105
      $region34: #{unet_innermost_forward.3} parent=31 // pred_check_branch
        %237 = sbr.rel (%p235) target = $region36
      $region35: #{unet_innermost_forward.3} parent=31 // pred_region
        _
      $region36: #{unet_innermost_forward.3} parent=31 // pred_fallthru
        _
    $region32: #{unet_innermost_forward.3} parent=5 // pred_fallthru
      _
    %p238 = scmp.le.s32.totalorder 2, %s9
    // Predicated region
    $region37: #{unet_innermost_forward.3} parent=5 // pred_check
      %p239 = pneg %p238
    $region38: #{unet_innermost_forward.3} parent=5 // pred_check_branch
      %241 = sbr.rel (%p239) target = $region40
    $region39: #{unet_innermost_forward.3} parent=5 // pred_region
      %s242 = ssub.s32 %s9, 2
      // Predicated region
      $region41: #{unet_innermost_forward.3} parent=39 // pred_check
        %p243 = pneg %p111
      $region42: #{unet_innermost_forward.3} parent=39 // pred_check_branch
        %245 = sbr.rel (%p243) target = $region44
      $region43: #{unet_innermost_forward.3} parent=39 // pred_region
        %p246 = scmp.lt.s32.totalorder %s15, 1
        %s247 = scalar_select %p246, %s15, 1
        %s248 = smul.addr %s247, 2
        %s249 = smul.addr %s248, 8
        %s250 = scalar_lea.vmem %s3, %s249
      $region44: #{unet_innermost_forward.3} parent=39 // pred_fallthru
        _
    $region40: #{unet_innermost_forward.3} parent=5 // pred_fallthru
      _
  $region6: #{unet_innermost_forward.3} parent=0 // loop_footer
    %s13 = sadd.s32 1, %s9
  $region7: #{unet_innermost_forward.3} parent=0 // loop_footer_branch
    %8 = sbr.rel target = $region3
  $region8: #{unet_innermost_forward.3} parent=0 // loop_exit
    _

</llo_original>
